<compile_context>
chip_gen: v6e
topology: v6e:2x2x1
jax: 0.10.0
libtpu: 0.0.40
codegen_flags: <defaults>
</compile_context>

<pallas_src>
import functools
import math

import jax
import jax.numpy as jnp
from jax.experimental import pallas as pl
from jax.experimental.pallas import tpu as pltpu


def _round_up(x: int, m: int) -> int:
    return ((x + m - 1) // m) * m


def _mlp_fused_kernel(*refs, num_layers: int, compute_dtype):
    """Fused MLP: o = Ln(relu(...relu(L1(x))...)). Activations stay in vregs."""
    x_ref = refs[0]
    o_ref = refs[-1]
    wb = refs[1:-1]  # (w0, b0, w1, b1, ...)

    h = x_ref[...]
    for i in range(num_layers):
        w = wb[2 * i][...]
        b = wb[2 * i + 1][...]  # (1, out_features) -> broadcasts over batch rows
        h = jnp.dot(h.astype(compute_dtype), w.astype(compute_dtype),
                    preferred_element_type=jnp.float32)
        h = h + b.astype(jnp.float32)
        if i < num_layers - 1:  # ReLU on hidden layers, identity on output
            h = jnp.maximum(h, 0.0)
    # Reshape is a row-major-preserving fold (lane-dense output path) or a no-op.
    o_ref[...] = h.reshape(o_ref.shape).astype(o_ref.dtype)


def _choose_tile(B: int, batch_tile: int, align: int) -> int:
    """Pick a batch tile: full block for tiny B, two tiles for mid B, big aligned tile otherwise."""
    if B <= 2 * align:
        return B                                   # single full block
    if B <= batch_tile:
        tb = _round_up(-(-B // 2), align)          # split into ~2 tiles (v7x: 2 TCs)
        return B if tb >= B else tb
    return max(align, (batch_tile // align) * align)


def mlp_forward(x: jax.Array, params, *, batch_tile: int = 1024,
                compute_dtype=jnp.bfloat16) -> jax.Array:
    """MLP.forward (ensemble_size=None) as one fused pallas_call.

    Supports arbitrary leading dims like nn.Linear: flatten then restore.
    """
    lead = x.shape[:-1]
    din = x.shape[-1]
    h = x.reshape((-1, din))
    B = h.shape[0]
    num_layers = len(params)
    dout = params[-1][0].shape[1]
    out_dtype = x.dtype

    # Cast weights once (halves weight DMA bytes for bf16); biases stay f32
    # (they are added post-matmul in f32).
    wb = []
    for (w, b) in params:
        wb.append(w.astype(compute_dtype))
        wb.append(b.astype(jnp.float32))

    widths = [din] + [w.shape[1] for (w, _) in params]
    w_elem = jnp.dtype(compute_dtype).itemsize
    in_elem = jnp.dtype(x.dtype).itemsize
    out_elem = jnp.dtype(out_dtype).itemsize
    weight_bytes = sum(w.shape[0] * w.shape[1] * w_elem + w.shape[1] * 4
                       for (w, _) in params)

    # TODO(synk): if resident weights exceed the VMEM budget (~tens of MiB),
    # tile the out_features dim with an extra "arbitrary" grid axis + f32
    # accumulator scratch instead of keeping every layer fully resident.

    flops = 2 * B * sum(w.shape[0] * w.shape[1] for (w, _) in params)
    bytes_accessed = int(h.size * in_elem
                         + sum(a.size * a.dtype.itemsize for a in wb)
                         + B * dout * out_elem)
    cost = pl.CostEstimate(flops=int(flops), transcendentals=0,
                           bytes_accessed=bytes_accessed)

    # Lane-dense output fold factor: fold `fold` batch rows into the lane dim so
    # each output block's last dim is a multiple of 128 (dense vst, no vst.msk).
    fold = 1 if dout % 128 == 0 else (128 // math.gcd(dout, 128))

    kernel = functools.partial(_mlp_fused_kernel, num_layers=num_layers,
                               compute_dtype=compute_dtype)

    def build_and_run(single_buffer_weights: bool, use_fold: bool):
        f = fold if (use_fold and fold > 1 and B % fold == 0) else 1
        align = 8 * f
        tb = _choose_tile(B, batch_tile, align)

        def footprint(t):
            nbuf = 1 if single_buffer_weights else 2
            return (2 * t * din * in_elem            # double-buffered input blocks
                    + 2 * t * dout * out_elem        # double-buffered output blocks
                    + 3 * t * max(widths) * 4        # f32 intermediates
                    + nbuf * weight_bytes)           # resident weights/biases

        budget = 40 << 20
        while tb > align and tb != B and footprint(tb) > budget:
            tb = max(align, ((tb // 2) // align) * align)

        grid = (pl.cdiv(B, tb),)
        vmem_limit = int(min(64 << 20, max(2 * footprint(tb), 16 << 20)))

        in_specs = [pl.BlockSpec((tb, din), lambda i: (i, 0))]
        for (w, _) in params:
            fi, fo = w.shape
            if single_buffer_weights:
                # Constant index_map => weights stay VMEM-resident; one buffer is enough.
                in_specs.append(pl.BlockSpec((fi, fo), lambda i: (0, 0),
                                             pipeline_mode=pl.Buffered(1)))
                in_specs.append(pl.BlockSpec((1, fo), lambda i: (0, 0),
                                             pipeline_mode=pl.Buffered(1)))
            else:
                in_specs.append(pl.BlockSpec((fi, fo), lambda i: (0, 0)))
                in_specs.append(pl.BlockSpec((1, fo), lambda i: (0, 0)))

        if f > 1:
            out_shape = jax.ShapeDtypeStruct((B // f, f * dout), out_dtype)
            out_spec = pl.BlockSpec((tb // f, f * dout), lambda i: (i, 0))
        else:
            out_shape = jax.ShapeDtypeStruct((B, dout), out_dtype)
            out_spec = pl.BlockSpec((tb, dout), lambda i: (i, 0))

        return pl.pallas_call(
            kernel,
            out_shape=out_shape,
            grid=grid,
            in_specs=in_specs,
            out_specs=out_spec,
            compiler_params=pltpu.CompilerParams(
                dimension_semantics=("parallel",),   # batch axis -> both TCs on v7x
                vmem_limit_bytes=vmem_limit,
            ),
            cost_estimate=cost,
        )(h, *wb)

    out = None
    last_err = None
    # Preference ladder: full optimizations first, progressively drop the
    # riskier ones (single-buffered weights, lane-dense output fold) if the
    # toolchain rejects them, so the kernel always compiles and runs.
    for single_buf, use_fold in ((True, True), (False, True), (True, False), (False, False)):
        try:
            out = build_and_run(single_buf, use_fold)
            break
        except Exception as e:  # fall back to a less aggressive config
            last_err = e
    if out is None:
        raise last_err

    return out.reshape(lead + (dout,))


def init_mlp_params(key, input_size, hidden_layers, output_size, dtype=jnp.float32):
    """PyTorch-default-style init: U(-1/sqrt(fan_in), 1/sqrt(fan_in)).

    Weights stored as (in_features, out_features); biases as (1, out_features).
    """
    layer_size = [input_size] + list(hidden_layers) + [output_size]
    params = []
    for i in range(len(layer_size) - 1):
        fan_in, fan_out = layer_size[i], layer_size[i + 1]
        key, kw, kb = jax.random.split(key, 3)
        bound = 1.0 / (fan_in ** 0.5)
        w = jax.random.uniform(kw, (fan_in, fan_out), dtype, -bound, bound)
        b = jax.random.uniform(kb, (1, fan_out), dtype, -bound, bound)
        params.append((w, b))
    return params


def mlp_forward_ref(x, params, compute_dtype=None):
    """Pure-JAX reference. compute_dtype=None => full f32 matmuls (HIGHEST precision)."""
    lead = x.shape[:-1]
    h = x.reshape((-1, x.shape[-1])).astype(jnp.float32)
    n = len(params)
    for i, (w, b) in enumerate(params):
        if compute_dtype is None:
            y = jnp.dot(h, w.astype(jnp.float32),
                        preferred_element_type=jnp.float32,
                        precision=jax.lax.Precision.HIGHEST)
        else:
            y = jnp.dot(h.astype(compute_dtype), w.astype(compute_dtype),
                        preferred_element_type=jnp.float32)
        h = y + b.astype(jnp.float32).reshape(1, -1)
        if i < n - 1:
            h = jnp.maximum(h, 0.0)
    return h.reshape(lead + (h.shape[-1],)).astype(x.dtype)


if __name__ == "__main__":
    key = jax.random.PRNGKey(0)
    kx1, kx2, kx3, kp = jax.random.split(key, 4)

    input_size, hidden_layers, output_size = 32, [64, 64], 16
    params = init_mlp_params(kp, input_size, hidden_layers, output_size)

    # Case 1: tiny batch (single full block, grid=(1,)).
    x1 = jax.random.normal(kx1, (8, input_size), jnp.float32)
    o1 = jax.block_until_ready(mlp_forward(x1, params))
    o1_f32 = jax.block_until_ready(mlp_forward(x1, params, compute_dtype=jnp.float32))
    assert o1.shape == (8, output_size)
    assert jnp.allclose(o1, mlp_forward_ref(x1, params, jnp.bfloat16), atol=2e-2, rtol=2e-2)
    assert jnp.allclose(o1_f32, mlp_forward_ref(x1, params), atol=1e-3, rtol=1e-3)

    # Case 2: leading dims + ragged last block (B=600 -> two tiles, masked tail).
    x2 = jax.random.normal(kx2, (3, 200, input_size), jnp.float32)
    o2 = jax.block_until_ready(mlp_forward(x2, params))
    o2_f32 = jax.block_until_ready(mlp_forward(x2, params, compute_dtype=jnp.float32))
    assert o2.shape == (3, 200, output_size)
    assert jnp.allclose(o2, mlp_forward_ref(x2, params, jnp.bfloat16), atol=2e-2, rtol=2e-2)
    assert jnp.allclose(o2_f32, mlp_forward_ref(x2, params), atol=1e-3, rtol=1e-3)

    # Case 3: batch larger than batch_tile -> multi-step big-tile grid.
    x3 = jax.random.normal(kx3, (2560, input_size), jnp.float32)
    o3 = jax.block_until_ready(mlp_forward(x3, params, batch_tile=1024))
    assert o3.shape == (2560, output_size)
    assert jnp.allclose(o3, mlp_forward_ref(x3, params, jnp.bfloat16), atol=2e-2, rtol=2e-2)

    print("KERNEL_OK")
</pallas_src>

<mosaic_0001>
module attributes {stable_mosaic.version = 11 : i64} {
  func.func @_mlp_fused_kernel(%arg0: i32, %arg1: memref<8x32xf32, #tpu.memory_space<vmem>>, %arg2: memref<32x64xbf16, #tpu.memory_space<vmem>>, %arg3: memref<1x64xf32, #tpu.memory_space<vmem>>, %arg4: memref<64x64xbf16, #tpu.memory_space<vmem>>, %arg5: memref<1x64xf32, #tpu.memory_space<vmem>>, %arg6: memref<64x16xbf16, #tpu.memory_space<vmem>>, %arg7: memref<1x16xf32, #tpu.memory_space<vmem>>, %arg8: memref<1x128xf32, #tpu.memory_space<vmem>>) attributes {dimension_semantics = [#tpu.dimension_semantics<parallel>], iteration_bounds = array<i64: 1>, scalar_prefetch = 0 : i64, scratch_operands = 0 : i64, tpu.core_type = #tpu.core_type<tc>, window_params = [{transform_indices = @transform_0, window_bounds = array<i64: 8, 32>}, {pipeline_mode = #tpu.pipeline_mode<synchronous>, transform_indices = @transform_1, window_bounds = array<i64: 32, 64>}, {pipeline_mode = #tpu.pipeline_mode<synchronous>, transform_indices = @transform_2, window_bounds = array<i64: 1, 64>}, {pipeline_mode = #tpu.pipeline_mode<synchronous>, transform_indices = @transform_3, window_bounds = array<i64: 64, 64>}, {pipeline_mode = #tpu.pipeline_mode<synchronous>, transform_indices = @transform_4, window_bounds = array<i64: 1, 64>}, {pipeline_mode = #tpu.pipeline_mode<synchronous>, transform_indices = @transform_5, window_bounds = array<i64: 64, 16>}, {pipeline_mode = #tpu.pipeline_mode<synchronous>, transform_indices = @transform_6, window_bounds = array<i64: 1, 16>}, {transform_indices = @transform_7, window_bounds = array<i64: 1, 128>}]} {
    %c0 = arith.constant 0 : index
    %c0_0 = arith.constant 0 : index
    %0 = vector.load %arg1[%c0, %c0_0] : memref<8x32xf32, #tpu.memory_space<vmem>>, vector<8x32xf32>
    %c0_1 = arith.constant 0 : index
    %c0_2 = arith.constant 0 : index
    %1 = vector.load %arg2[%c0_1, %c0_2] : memref<32x64xbf16, #tpu.memory_space<vmem>>, vector<32x64xbf16>
    %c0_3 = arith.constant 0 : index
    %c0_4 = arith.constant 0 : index
    %2 = vector.load %arg3[%c0_3, %c0_4] : memref<1x64xf32, #tpu.memory_space<vmem>>, vector<1x64xf32>
    %3 = arith.truncf %0 : vector<8x32xf32> to vector<8x32xbf16>
    %cst = arith.constant dense<0.000000e+00> : vector<8x64xf32>
    %4 = tpu.matmul %3, %1, %cst {dimension_numbers = #tpu.dot_dimension_numbers<[1], [0], [0], [1], [0, 0, 1, 1], [], []>} : vector<8x32xbf16>, vector<32x64xbf16>, vector<8x64xf32> -> vector<8x64xf32>
    %5 = vector.broadcast %2 : vector<1x64xf32> to vector<8x64xf32>
    %6 = arith.addf %4, %5 : vector<8x64xf32>
    %cst_5 = arith.constant 0.000000e+00 : f32
    %7 = vector.broadcast %cst_5 : f32 to vector<8x64xf32>
    %8 = arith.maximumf %6, %7 : vector<8x64xf32>
    %c0_6 = arith.constant 0 : index
    %c0_7 = arith.constant 0 : index
    %9 = vector.load %arg4[%c0_6, %c0_7] : memref<64x64xbf16, #tpu.memory_space<vmem>>, vector<64x64xbf16>
    %c0_8 = arith.constant 0 : index
    %c0_9 = arith.constant 0 : index
    %10 = vector.load %arg5[%c0_8, %c0_9] : memref<1x64xf32, #tpu.memory_space<vmem>>, vector<1x64xf32>
    %11 = arith.truncf %8 : vector<8x64xf32> to vector<8x64xbf16>
    %cst_10 = arith.constant dense<0.000000e+00> : vector<8x64xf32>
    %12 = tpu.matmul %11, %9, %cst_10 {dimension_numbers = #tpu.dot_dimension_numbers<[1], [0], [0], [1], [0, 0, 1, 1], [], []>} : vector<8x64xbf16>, vector<64x64xbf16>, vector<8x64xf32> -> vector<8x64xf32>
    %13 = vector.broadcast %10 : vector<1x64xf32> to vector<8x64xf32>
    %14 = arith.addf %12, %13 : vector<8x64xf32>
    %cst_11 = arith.constant 0.000000e+00 : f32
    %15 = vector.broadcast %cst_11 : f32 to vector<8x64xf32>
    %16 = arith.maximumf %14, %15 : vector<8x64xf32>
    %c0_12 = arith.constant 0 : index
    %c0_13 = arith.constant 0 : index
    %17 = vector.load %arg6[%c0_12, %c0_13] : memref<64x16xbf16, #tpu.memory_space<vmem>>, vector<64x16xbf16>
    %c0_14 = arith.constant 0 : index
    %c0_15 = arith.constant 0 : index
    %18 = vector.load %arg7[%c0_14, %c0_15] : memref<1x16xf32, #tpu.memory_space<vmem>>, vector<1x16xf32>
    %19 = arith.truncf %16 : vector<8x64xf32> to vector<8x64xbf16>
    %cst_16 = arith.constant dense<0.000000e+00> : vector<8x16xf32>
    %20 = tpu.matmul %19, %17, %cst_16 {dimension_numbers = #tpu.dot_dimension_numbers<[1], [0], [0], [1], [0, 0, 1, 1], [], []>} : vector<8x64xbf16>, vector<64x16xbf16>, vector<8x16xf32> -> vector<8x16xf32>
    %21 = vector.broadcast %18 : vector<1x16xf32> to vector<8x16xf32>
    %22 = arith.addf %20, %21 : vector<8x16xf32>
    %23 = vector.shape_cast %22 : vector<8x16xf32> to vector<1x128xf32>
    %c0_17 = arith.constant 0 : index
    %c0_18 = arith.constant 0 : index
    %24 = vector.load %arg8[%c0_17, %c0_18] : memref<1x128xf32, #tpu.memory_space<vmem>>, vector<1x128xf32>
    tpu.vector_store %arg8[%c0_17, %c0_18], %23 {strides = array<i32>} : memref<1x128xf32, #tpu.memory_space<vmem>>, vector<1x128xf32>,
    return
  }
  func.func @transform_0(%arg0: i32) -> (i32, i32) {
    %c0_i32 = arith.constant 0 : i32
    %c0_i32_0 = arith.constant 0 : i32
    return %arg0, %c0_i32 : i32, i32
  }
  func.func @transform_1(%arg0: i32) -> (i32, i32) {
    %c0_i32 = arith.constant 0 : i32
    %c0_i32_0 = arith.constant 0 : i32
    %c0_i32_1 = arith.constant 0 : i32
    return %c0_i32, %c0_i32_0 : i32, i32
  }
  func.func @transform_2(%arg0: i32) -> (i32, i32) {
    %c0_i32 = arith.constant 0 : i32
    %c0_i32_0 = arith.constant 0 : i32
    %c0_i32_1 = arith.constant 0 : i32
    return %c0_i32, %c0_i32_0 : i32, i32
  }
  func.func @transform_3(%arg0: i32) -> (i32, i32) {
    %c0_i32 = arith.constant 0 : i32
    %c0_i32_0 = arith.constant 0 : i32
    %c0_i32_1 = arith.constant 0 : i32
    return %c0_i32, %c0_i32_0 : i32, i32
  }
  func.func @transform_4(%arg0: i32) -> (i32, i32) {
    %c0_i32 = arith.constant 0 : i32
    %c0_i32_0 = arith.constant 0 : i32
    %c0_i32_1 = arith.constant 0 : i32
    return %c0_i32, %c0_i32_0 : i32, i32
  }
  func.func @transform_5(%arg0: i32) -> (i32, i32) {
    %c0_i32 = arith.constant 0 : i32
    %c0_i32_0 = arith.constant 0 : i32
    %c0_i32_1 = arith.constant 0 : i32
    return %c0_i32, %c0_i32_0 : i32, i32
  }
  func.func @transform_6(%arg0: i32) -> (i32, i32) {
    %c0_i32 = arith.constant 0 : i32
    %c0_i32_0 = arith.constant 0 : i32
    %c0_i32_1 = arith.constant 0 : i32
    return %c0_i32, %c0_i32_0 : i32, i32
  }
  func.func @transform_7(%arg0: i32) -> (i32, i32) {
    %c0_i32 = arith.constant 0 : i32
    %c0_i32_0 = arith.constant 0 : i32
    return %arg0, %c0_i32 : i32, i32
  }
}

module attributes {stable_mosaic.version = 11 : i64} {
  func.func @_mlp_fused_kernel(%arg0: i32, %arg1: memref<8x32xf32, #tpu.memory_space<vmem>>, %arg2: memref<32x64xbf16, #tpu.memory_space<vmem>>, %arg3: memref<1x64xf32, #tpu.memory_space<vmem>>, %arg4: memref<64x64xbf16, #tpu.memory_space<vmem>>, %arg5: memref<1x64xf32, #tpu.memory_space<vmem>>, %arg6: memref<64x16xbf16, #tpu.memory_space<vmem>>, %arg7: memref<1x16xf32, #tpu.memory_space<vmem>>, %arg8: memref<1x128xf32, #tpu.memory_space<vmem>>) attributes {dimension_semantics = [#tpu.dimension_semantics<parallel>], iteration_bounds = array<i64: 1>, scalar_prefetch = 0 : i64, scratch_operands = 0 : i64, tpu.core_type = #tpu.core_type<tc>, window_params = [{transform_indices = @transform_0, window_bounds = array<i64: 8, 32>}, {pipeline_mode = #tpu.pipeline_mode<synchronous>, transform_indices = @transform_1, window_bounds = array<i64: 32, 64>}, {pipeline_mode = #tpu.pipeline_mode<synchronous>, transform_indices = @transform_2, window_bounds = array<i64: 1, 64>}, {pipeline_mode = #tpu.pipeline_mode<synchronous>, transform_indices = @transform_3, window_bounds = array<i64: 64, 64>}, {pipeline_mode = #tpu.pipeline_mode<synchronous>, transform_indices = @transform_4, window_bounds = array<i64: 1, 64>}, {pipeline_mode = #tpu.pipeline_mode<synchronous>, transform_indices = @transform_5, window_bounds = array<i64: 64, 16>}, {pipeline_mode = #tpu.pipeline_mode<synchronous>, transform_indices = @transform_6, window_bounds = array<i64: 1, 16>}, {transform_indices = @transform_7, window_bounds = array<i64: 1, 128>}]} {
    %c0 = arith.constant 0 : index
    %c0_0 = arith.constant 0 : index
    %0 = vector.load %arg1[%c0, %c0_0] : memref<8x32xf32, #tpu.memory_space<vmem>>, vector<8x32xf32>
    %c0_1 = arith.constant 0 : index
    %c0_2 = arith.constant 0 : index
    %1 = vector.load %arg2[%c0_1, %c0_2] : memref<32x64xbf16, #tpu.memory_space<vmem>>, vector<32x64xbf16>
    %c0_3 = arith.constant 0 : index
    %c0_4 = arith.constant 0 : index
    %2 = vector.load %arg3[%c0_3, %c0_4] : memref<1x64xf32, #tpu.memory_space<vmem>>, vector<1x64xf32>
    %3 = arith.truncf %0 : vector<8x32xf32> to vector<8x32xbf16>
    %cst = arith.constant dense<0.000000e+00> : vector<8x64xf32>
    %4 = tpu.matmul %3, %1, %cst {dimension_numbers = #tpu.dot_dimension_numbers<[1], [0], [0], [1], [0, 0, 1, 1], [], []>} : vector<8x32xbf16>, vector<32x64xbf16>, vector<8x64xf32> -> vector<8x64xf32>
    %5 = vector.broadcast %2 : vector<1x64xf32> to vector<8x64xf32>
    %6 = arith.addf %4, %5 : vector<8x64xf32>
    %cst_5 = arith.constant 0.000000e+00 : f32
    %7 = vector.broadcast %cst_5 : f32 to vector<8x64xf32>
    %8 = arith.maximumf %6, %7 : vector<8x64xf32>
    %c0_6 = arith.constant 0 : index
    %c0_7 = arith.constant 0 : index
    %9 = vector.load %arg4[%c0_6, %c0_7] : memref<64x64xbf16, #tpu.memory_space<vmem>>, vector<64x64xbf16>
    %c0_8 = arith.constant 0 : index
    %c0_9 = arith.constant 0 : index
    %10 = vector.load %arg5[%c0_8, %c0_9] : memref<1x64xf32, #tpu.memory_space<vmem>>, vector<1x64xf32>
    %11 = arith.truncf %8 : vector<8x64xf32> to vector<8x64xbf16>
    %cst_10 = arith.constant dense<0.000000e+00> : vector<8x64xf32>
    %12 = tpu.matmul %11, %9, %cst_10 {dimension_numbers = #tpu.dot_dimension_numbers<[1], [0], [0], [1], [0, 0, 1, 1], [], []>} : vector<8x64xbf16>, vector<64x64xbf16>, vector<8x64xf32> -> vector<8x64xf32>
    %13 = vector.broadcast %10 : vector<1x64xf32> to vector<8x64xf32>
    %14 = arith.addf %12, %13 : vector<8x64xf32>
    %cst_11 = arith.constant 0.000000e+00 : f32
    %15 = vector.broadcast %cst_11 : f32 to vector<8x64xf32>
    %16 = arith.maximumf %14, %15 : vector<8x64xf32>
    %c0_12 = arith.constant 0 : index
    %c0_13 = arith.constant 0 : index
    %17 = vector.load %arg6[%c0_12, %c0_13] : memref<64x16xbf16, #tpu.memory_space<vmem>>, vector<64x16xbf16>
    %c0_14 = arith.constant 0 : index
    %c0_15 = arith.constant 0 : index
    %18 = vector.load %arg7[%c0_14, %c0_15] : memref<1x16xf32, #tpu.memory_space<vmem>>, vector<1x16xf32>
    %19 = arith.truncf %16 : vector<8x64xf32> to vector<8x64xbf16>
    %cst_16 = arith.constant dense<0.000000e+00> : vector<8x16xf32>
    %20 = tpu.matmul %19, %17, %cst_16 {dimension_numbers = #tpu.dot_dimension_numbers<[1], [0], [0], [1], [0, 0, 1, 1], [], []>} : vector<8x64xbf16>, vector<64x16xbf16>, vector<8x16xf32> -> vector<8x16xf32>
    %21 = vector.broadcast %18 : vector<1x16xf32> to vector<8x16xf32>
    %22 = arith.addf %20, %21 : vector<8x16xf32>
    %23 = vector.shape_cast %22 : vector<8x16xf32> to vector<1x128xf32>
    %c0_17 = arith.constant 0 : index
    %c0_18 = arith.constant 0 : index
    %24 = vector.load %arg8[%c0_17, %c0_18] : memref<1x128xf32, #tpu.memory_space<vmem>>, vector<1x128xf32>
    tpu.vector_store %arg8[%c0_17, %c0_18], %23 {strides = array<i32>} : memref<1x128xf32, #tpu.memory_space<vmem>>, vector<1x128xf32>,
    return
  }
  func.func @transform_0(%arg0: i32) -> (i32, i32) {
    %c0_i32 = arith.constant 0 : i32
    %c0_i32_0 = arith.constant 0 : i32
    return %arg0, %c0_i32 : i32, i32
  }
  func.func @transform_1(%arg0: i32) -> (i32, i32) {
    %c0_i32 = arith.constant 0 : i32
    %c0_i32_0 = arith.constant 0 : i32
    %c0_i32_1 = arith.constant 0 : i32
    return %c0_i32, %c0_i32_0 : i32, i32
  }
  func.func @transform_2(%arg0: i32) -> (i32, i32) {
    %c0_i32 = arith.constant 0 : i32
    %c0_i32_0 = arith.constant 0 : i32
    %c0_i32_1 = arith.constant 0 : i32
    return %c0_i32, %c0_i32_0 : i32, i32
  }
  func.func @transform_3(%arg0: i32) -> (i32, i32) {
    %c0_i32 = arith.constant 0 : i32
    %c0_i32_0 = arith.constant 0 : i32
    %c0_i32_1 = arith.constant 0 : i32
    return %c0_i32, %c0_i32_0 : i32, i32
  }
  func.func @transform_4(%arg0: i32) -> (i32, i32) {
    %c0_i32 = arith.constant 0 : i32
    %c0_i32_0 = arith.constant 0 : i32
    %c0_i32_1 = arith.constant 0 : i32
    return %c0_i32, %c0_i32_0 : i32, i32
  }
  func.func @transform_5(%arg0: i32) -> (i32, i32) {
    %c0_i32 = arith.constant 0 : i32
    %c0_i32_0 = arith.constant 0 : i32
    %c0_i32_1 = arith.constant 0 : i32
    return %c0_i32, %c0_i32_0 : i32, i32
  }
  func.func @transform_6(%arg0: i32) -> (i32, i32) {
    %c0_i32 = arith.constant 0 : i32
    %c0_i32_0 = arith.constant 0 : i32
    %c0_i32_1 = arith.constant 0 : i32
    return %c0_i32, %c0_i32_0 : i32, i32
  }
  func.func @transform_7(%arg0: i32) -> (i32, i32) {
    %c0_i32 = arith.constant 0 : i32
    %c0_i32_0 = arith.constant 0 : i32
    return %arg0, %c0_i32 : i32, i32
  }
}

module attributes {stable_mosaic.version = 11 : i64} {
  func.func @_mlp_fused_kernel(%arg0: i32, %arg1: memref<8x32xf32, #tpu.memory_space<vmem>>, %arg2: memref<32x64xbf16, #tpu.memory_space<vmem>>, %arg3: memref<1x64xf32, #tpu.memory_space<vmem>>, %arg4: memref<64x64xbf16, #tpu.memory_space<vmem>>, %arg5: memref<1x64xf32, #tpu.memory_space<vmem>>, %arg6: memref<64x16xbf16, #tpu.memory_space<vmem>>, %arg7: memref<1x16xf32, #tpu.memory_space<vmem>>, %arg8: memref<8x16xf32, #tpu.memory_space<vmem>>) attributes {dimension_semantics = [#tpu.dimension_semantics<parallel>], iteration_bounds = array<i64: 1>, scalar_prefetch = 0 : i64, scratch_operands = 0 : i64, tpu.core_type = #tpu.core_type<tc>, window_params = [{transform_indices = @transform_0, window_bounds = array<i64: 8, 32>}, {pipeline_mode = #tpu.pipeline_mode<synchronous>, transform_indices = @transform_1, window_bounds = array<i64: 32, 64>}, {pipeline_mode = #tpu.pipeline_mode<synchronous>, transform_indices = @transform_2, window_bounds = array<i64: 1, 64>}, {pipeline_mode = #tpu.pipeline_mode<synchronous>, transform_indices = @transform_3, window_bounds = array<i64: 64, 64>}, {pipeline_mode = #tpu.pipeline_mode<synchronous>, transform_indices = @transform_4, window_bounds = array<i64: 1, 64>}, {pipeline_mode = #tpu.pipeline_mode<synchronous>, transform_indices = @transform_5, window_bounds = array<i64: 64, 16>}, {pipeline_mode = #tpu.pipeline_mode<synchronous>, transform_indices = @transform_6, window_bounds = array<i64: 1, 16>}, {transform_indices = @transform_7, window_bounds = array<i64: 8, 16>}]} {
    %c0 = arith.constant 0 : index
    %c0_0 = arith.constant 0 : index
    %0 = vector.load %arg1[%c0, %c0_0] : memref<8x32xf32, #tpu.memory_space<vmem>>, vector<8x32xf32>
    %c0_1 = arith.constant 0 : index
    %c0_2 = arith.constant 0 : index
    %1 = vector.load %arg2[%c0_1, %c0_2] : memref<32x64xbf16, #tpu.memory_space<vmem>>, vector<32x64xbf16>
    %c0_3 = arith.constant 0 : index
    %c0_4 = arith.constant 0 : index
    %2 = vector.load %arg3[%c0_3, %c0_4] : memref<1x64xf32, #tpu.memory_space<vmem>>, vector<1x64xf32>
    %3 = arith.truncf %0 : vector<8x32xf32> to vector<8x32xbf16>
    %cst = arith.constant dense<0.000000e+00> : vector<8x64xf32>
    %4 = tpu.matmul %3, %1, %cst {dimension_numbers = #tpu.dot_dimension_numbers<[1], [0], [0], [1], [0, 0, 1, 1], [], []>} : vector<8x32xbf16>, vector<32x64xbf16>, vector<8x64xf32> -> vector<8x64xf32>
    %5 = vector.broadcast %2 : vector<1x64xf32> to vector<8x64xf32>
    %6 = arith.addf %4, %5 : vector<8x64xf32>
    %cst_5 = arith.constant 0.000000e+00 : f32
    %7 = vector.broadcast %cst_5 : f32 to vector<8x64xf32>
    %8 = arith.maximumf %6, %7 : vector<8x64xf32>
    %c0_6 = arith.constant 0 : index
    %c0_7 = arith.constant 0 : index
    %9 = vector.load %arg4[%c0_6, %c0_7] : memref<64x64xbf16, #tpu.memory_space<vmem>>, vector<64x64xbf16>
    %c0_8 = arith.constant 0 : index
    %c0_9 = arith.constant 0 : index
    %10 = vector.load %arg5[%c0_8, %c0_9] : memref<1x64xf32, #tpu.memory_space<vmem>>, vector<1x64xf32>
    %11 = arith.truncf %8 : vector<8x64xf32> to vector<8x64xbf16>
    %cst_10 = arith.constant dense<0.000000e+00> : vector<8x64xf32>
    %12 = tpu.matmul %11, %9, %cst_10 {dimension_numbers = #tpu.dot_dimension_numbers<[1], [0], [0], [1], [0, 0, 1, 1], [], []>} : vector<8x64xbf16>, vector<64x64xbf16>, vector<8x64xf32> -> vector<8x64xf32>
    %13 = vector.broadcast %10 : vector<1x64xf32> to vector<8x64xf32>
    %14 = arith.addf %12, %13 : vector<8x64xf32>
    %cst_11 = arith.constant 0.000000e+00 : f32
    %15 = vector.broadcast %cst_11 : f32 to vector<8x64xf32>
    %16 = arith.maximumf %14, %15 : vector<8x64xf32>
    %c0_12 = arith.constant 0 : index
    %c0_13 = arith.constant 0 : index
    %17 = vector.load %arg6[%c0_12, %c0_13] : memref<64x16xbf16, #tpu.memory_space<vmem>>, vector<64x16xbf16>
    %c0_14 = arith.constant 0 : index
    %c0_15 = arith.constant 0 : index
    %18 = vector.load %arg7[%c0_14, %c0_15] : memref<1x16xf32, #tpu.memory_space<vmem>>, vector<1x16xf32>
    %19 = arith.truncf %16 : vector<8x64xf32> to vector<8x64xbf16>
    %cst_16 = arith.constant dense<0.000000e+00> : vector<8x16xf32>
    %20 = tpu.matmul %19, %17, %cst_16 {dimension_numbers = #tpu.dot_dimension_numbers<[1], [0], [0], [1], [0, 0, 1, 1], [], []>} : vector<8x64xbf16>, vector<64x16xbf16>, vector<8x16xf32> -> vector<8x16xf32>
    %21 = vector.broadcast %18 : vector<1x16xf32> to vector<8x16xf32>
    %22 = arith.addf %20, %21 : vector<8x16xf32>
    %c0_17 = arith.constant 0 : index
    %c0_18 = arith.constant 0 : index
    %23 = vector.load %arg8[%c0_17, %c0_18] : memref<8x16xf32, #tpu.memory_space<vmem>>, vector<8x16xf32>
    tpu.vector_store %arg8[%c0_17, %c0_18], %22 {strides = array<i32>} : memref<8x16xf32, #tpu.memory_space<vmem>>, vector<8x16xf32>,
    return
  }
  func.func @transform_0(%arg0: i32) -> (i32, i32) {
    %c0_i32 = arith.constant 0 : i32
    %c0_i32_0 = arith.constant 0 : i32
    return %arg0, %c0_i32 : i32, i32
  }
  func.func @transform_1(%arg0: i32) -> (i32, i32) {
    %c0_i32 = arith.constant 0 : i32
    %c0_i32_0 = arith.constant 0 : i32
    %c0_i32_1 = arith.constant 0 : i32
    return %c0_i32, %c0_i32_0 : i32, i32
  }
  func.func @transform_2(%arg0: i32) -> (i32, i32) {
    %c0_i32 = arith.constant 0 : i32
    %c0_i32_0 = arith.constant 0 : i32
    %c0_i32_1 = arith.constant 0 : i32
    return %c0_i32, %c0_i32_0 : i32, i32
  }
  func.func @transform_3(%arg0: i32) -> (i32, i32) {
    %c0_i32 = arith.constant 0 : i32
    %c0_i32_0 = arith.constant 0 : i32
    %c0_i32_1 = arith.constant 0 : i32
    return %c0_i32, %c0_i32_0 : i32, i32
  }
  func.func @transform_4(%arg0: i32) -> (i32, i32) {
    %c0_i32 = arith.constant 0 : i32
    %c0_i32_0 = arith.constant 0 : i32
    %c0_i32_1 = arith.constant 0 : i32
    return %c0_i32, %c0_i32_0 : i32, i32
  }
  func.func @transform_5(%arg0: i32) -> (i32, i32) {
    %c0_i32 = arith.constant 0 : i32
    %c0_i32_0 = arith.constant 0 : i32
    %c0_i32_1 = arith.constant 0 : i32
    return %c0_i32, %c0_i32_0 : i32, i32
  }
  func.func @transform_6(%arg0: i32) -> (i32, i32) {
    %c0_i32 = arith.constant 0 : i32
    %c0_i32_0 = arith.constant 0 : i32
    %c0_i32_1 = arith.constant 0 : i32
    return %c0_i32, %c0_i32_0 : i32, i32
  }
  func.func @transform_7(%arg0: i32) -> (i32, i32) {
    %c0_i32 = arith.constant 0 : i32
    %c0_i32_0 = arith.constant 0 : i32
    return %arg0, %c0_i32 : i32, i32
  }
}

module attributes {stable_mosaic.version = 11 : i64} {
  func.func @_mlp_fused_kernel(%arg0: i32, %arg1: memref<8x32xf32, #tpu.memory_space<vmem>>, %arg2: memref<32x64xbf16, #tpu.memory_space<vmem>>, %arg3: memref<1x64xf32, #tpu.memory_space<vmem>>, %arg4: memref<64x64xbf16, #tpu.memory_space<vmem>>, %arg5: memref<1x64xf32, #tpu.memory_space<vmem>>, %arg6: memref<64x16xbf16, #tpu.memory_space<vmem>>, %arg7: memref<1x16xf32, #tpu.memory_space<vmem>>, %arg8: memref<8x16xf32, #tpu.memory_space<vmem>>) attributes {dimension_semantics = [#tpu.dimension_semantics<parallel>], iteration_bounds = array<i64: 1>, scalar_prefetch = 0 : i64, scratch_operands = 0 : i64, tpu.core_type = #tpu.core_type<tc>, window_params = [{transform_indices = @transform_0, window_bounds = array<i64: 8, 32>}, {pipeline_mode = #tpu.pipeline_mode<synchronous>, transform_indices = @transform_1, window_bounds = array<i64: 32, 64>}, {pipeline_mode = #tpu.pipeline_mode<synchronous>, transform_indices = @transform_2, window_bounds = array<i64: 1, 64>}, {pipeline_mode = #tpu.pipeline_mode<synchronous>, transform_indices = @transform_3, window_bounds = array<i64: 64, 64>}, {pipeline_mode = #tpu.pipeline_mode<synchronous>, transform_indices = @transform_4, window_bounds = array<i64: 1, 64>}, {pipeline_mode = #tpu.pipeline_mode<synchronous>, transform_indices = @transform_5, window_bounds = array<i64: 64, 16>}, {pipeline_mode = #tpu.pipeline_mode<synchronous>, transform_indices = @transform_6, window_bounds = array<i64: 1, 16>}, {transform_indices = @transform_7, window_bounds = array<i64: 8, 16>}]} {
    %c0 = arith.constant 0 : index
    %c0_0 = arith.constant 0 : index
    %0 = vector.load %arg1[%c0, %c0_0] : memref<8x32xf32, #tpu.memory_space<vmem>>, vector<8x32xf32>
    %c0_1 = arith.constant 0 : index
    %c0_2 = arith.constant 0 : index
    %1 = vector.load %arg2[%c0_1, %c0_2] : memref<32x64xbf16, #tpu.memory_space<vmem>>, vector<32x64xbf16>
    %c0_3 = arith.constant 0 : index
    %c0_4 = arith.constant 0 : index
    %2 = vector.load %arg3[%c0_3, %c0_4] : memref<1x64xf32, #tpu.memory_space<vmem>>, vector<1x64xf32>
    %3 = arith.truncf %0 : vector<8x32xf32> to vector<8x32xbf16>
    %cst = arith.constant dense<0.000000e+00> : vector<8x64xf32>
    %4 = tpu.matmul %3, %1, %cst {dimension_numbers = #tpu.dot_dimension_numbers<[1], [0], [0], [1], [0, 0, 1, 1], [], []>} : vector<8x32xbf16>, vector<32x64xbf16>, vector<8x64xf32> -> vector<8x64xf32>
    %5 = vector.broadcast %2 : vector<1x64xf32> to vector<8x64xf32>
    %6 = arith.addf %4, %5 : vector<8x64xf32>
    %cst_5 = arith.constant 0.000000e+00 : f32
    %7 = vector.broadcast %cst_5 : f32 to vector<8x64xf32>
    %8 = arith.maximumf %6, %7 : vector<8x64xf32>
    %c0_6 = arith.constant 0 : index
    %c0_7 = arith.constant 0 : index
    %9 = vector.load %arg4[%c0_6, %c0_7] : memref<64x64xbf16, #tpu.memory_space<vmem>>, vector<64x64xbf16>
    %c0_8 = arith.constant 0 : index
    %c0_9 = arith.constant 0 : index
    %10 = vector.load %arg5[%c0_8, %c0_9] : memref<1x64xf32, #tpu.memory_space<vmem>>, vector<1x64xf32>
    %11 = arith.truncf %8 : vector<8x64xf32> to vector<8x64xbf16>
    %cst_10 = arith.constant dense<0.000000e+00> : vector<8x64xf32>
    %12 = tpu.matmul %11, %9, %cst_10 {dimension_numbers = #tpu.dot_dimension_numbers<[1], [0], [0], [1], [0, 0, 1, 1], [], []>} : vector<8x64xbf16>, vector<64x64xbf16>, vector<8x64xf32> -> vector<8x64xf32>
    %13 = vector.broadcast %10 : vector<1x64xf32> to vector<8x64xf32>
    %14 = arith.addf %12, %13 : vector<8x64xf32>
    %cst_11 = arith.constant 0.000000e+00 : f32
    %15 = vector.broadcast %cst_11 : f32 to vector<8x64xf32>
    %16 = arith.maximumf %14, %15 : vector<8x64xf32>
    %c0_12 = arith.constant 0 : index
    %c0_13 = arith.constant 0 : index
    %17 = vector.load %arg6[%c0_12, %c0_13] : memref<64x16xbf16, #tpu.memory_space<vmem>>, vector<64x16xbf16>
    %c0_14 = arith.constant 0 : index
    %c0_15 = arith.constant 0 : index
    %18 = vector.load %arg7[%c0_14, %c0_15] : memref<1x16xf32, #tpu.memory_space<vmem>>, vector<1x16xf32>
    %19 = arith.truncf %16 : vector<8x64xf32> to vector<8x64xbf16>
    %cst_16 = arith.constant dense<0.000000e+00> : vector<8x16xf32>
    %20 = tpu.matmul %19, %17, %cst_16 {dimension_numbers = #tpu.dot_dimension_numbers<[1], [0], [0], [1], [0, 0, 1, 1], [], []>} : vector<8x64xbf16>, vector<64x16xbf16>, vector<8x16xf32> -> vector<8x16xf32>
    %21 = vector.broadcast %18 : vector<1x16xf32> to vector<8x16xf32>
    %22 = arith.addf %20, %21 : vector<8x16xf32>
    %c0_17 = arith.constant 0 : index
    %c0_18 = arith.constant 0 : index
    %23 = vector.load %arg8[%c0_17, %c0_18] : memref<8x16xf32, #tpu.memory_space<vmem>>, vector<8x16xf32>
    tpu.vector_store %arg8[%c0_17, %c0_18], %22 {strides = array<i32>} : memref<8x16xf32, #tpu.memory_space<vmem>>, vector<8x16xf32>,
    return
  }
  func.func @transform_0(%arg0: i32) -> (i32, i32) {
    %c0_i32 = arith.constant 0 : i32
    %c0_i32_0 = arith.constant 0 : i32
    return %arg0, %c0_i32 : i32, i32
  }
  func.func @transform_1(%arg0: i32) -> (i32, i32) {
    %c0_i32 = arith.constant 0 : i32
    %c0_i32_0 = arith.constant 0 : i32
    %c0_i32_1 = arith.constant 0 : i32
    return %c0_i32, %c0_i32_0 : i32, i32
  }
  func.func @transform_2(%arg0: i32) -> (i32, i32) {
    %c0_i32 = arith.constant 0 : i32
    %c0_i32_0 = arith.constant 0 : i32
    %c0_i32_1 = arith.constant 0 : i32
    return %c0_i32, %c0_i32_0 : i32, i32
  }
  func.func @transform_3(%arg0: i32) -> (i32, i32) {
    %c0_i32 = arith.constant 0 : i32
    %c0_i32_0 = arith.constant 0 : i32
    %c0_i32_1 = arith.constant 0 : i32
    return %c0_i32, %c0_i32_0 : i32, i32
  }
  func.func @transform_4(%arg0: i32) -> (i32, i32) {
    %c0_i32 = arith.constant 0 : i32
    %c0_i32_0 = arith.constant 0 : i32
    %c0_i32_1 = arith.constant 0 : i32
    return %c0_i32, %c0_i32_0 : i32, i32
  }
  func.func @transform_5(%arg0: i32) -> (i32, i32) {
    %c0_i32 = arith.constant 0 : i32
    %c0_i32_0 = arith.constant 0 : i32
    %c0_i32_1 = arith.constant 0 : i32
    return %c0_i32, %c0_i32_0 : i32, i32
  }
  func.func @transform_6(%arg0: i32) -> (i32, i32) {
    %c0_i32 = arith.constant 0 : i32
    %c0_i32_0 = arith.constant 0 : i32
    %c0_i32_1 = arith.constant 0 : i32
    return %c0_i32, %c0_i32_0 : i32, i32
  }
  func.func @transform_7(%arg0: i32) -> (i32, i32) {
    %c0_i32 = arith.constant 0 : i32
    %c0_i32_0 = arith.constant 0 : i32
    return %arg0, %c0_i32 : i32, i32
  }
}

</mosaic_0001>

<llo_original>
// kernel: tpu_custom_call.1
$region0: #{tpu_custom_call.1}
  #allocation0 [shape = 'u32[]', space=smem, size = 0x4, offset = 0x4, fixed_abs, tag = 'smem constant byte address 0x4 - core index']
  #allocation1 [shape = 'u32[144,128]{1,0:T(1,128)}', space=vmem, size = 0x12000, scoped, tag = 'internal scratch']
  %s0 = inlined_call_operand.vmem [shape: f32[8,32], index: 0, kind: input, shape index: {}]
  %s1 = inlined_call_operand.hbm [shape: bf16[32,64], index: 1, kind: input, shape index: {}]
  %s2 = inlined_call_operand.vmem [shape: f32[1,64], index: 2, kind: input, shape index: {}]
  %s3 = inlined_call_operand.vmem [shape: bf16[64,64], index: 3, kind: input, shape index: {}]
  %s4 = inlined_call_operand.hbm [shape: f32[1,64], index: 4, kind: input, shape index: {}]
  %s5 = inlined_call_operand.vmem [shape: bf16[64,16], index: 5, kind: input, shape index: {}]
  %s6 = inlined_call_operand.vmem [shape: f32[1,16], index: 6, kind: input, shape index: {}]
  %s7 = inlined_call_operand.hbm [shape: f32[8,16], index: 7, kind: output, shape index: {}]
  %s8 = sld [smem:[#allocation0]]
  $region46: #{tpu_custom_call.1} parent=0
    _
  %s10 = ssub.s32 1, %s8
  %s11 = scalar_select 0, %s10, %s8
  $region1: #{tpu_custom_call.1} parent=0
    #allocation2 [shape = 'u8[8192]{0}', space=vmem, size = 0x2000, scoped, tag = 'input window, operand 1, single buffered']
    #allocation3 [shape = 's32[1]{0}', space=sflag, size = 0x4, scoped, tag = 'scoped memory for tpu_custom_call.1']
    #allocation4 [shape = 's32[1]{0}', space=sflag, size = 0x4, scoped, tag = 'scoped memory for tpu_custom_call.1']
    #allocation5 [shape = 'u8[512]{0}', space=vmem, size = 0x400, scoped, tag = 'input window, operand 4, single buffered']
    #allocation6 [shape = 's32[1]{0}', space=sflag, size = 0x4, scoped, tag = 'scoped memory for tpu_custom_call.1']
    #allocation7 [shape = 'u8[4096]{0}', space=vmem, size = 0x1000, scoped, tag = 'output window, operand 0, single buffered']
    %12 = vsyncpa [#allocation3], 0
    %13 = vsyncpa [#allocation6], 0
    %14 = vsyncpa [#allocation4], 0
    // Predicated region
    $region2: #{tpu_custom_call.1} parent=1 // pred_check
      _
    $region3: #{tpu_custom_call.1} parent=1 // pred_check_branch
      %16 = sbr.rel (0) target = $region5
    $region4: #{tpu_custom_call.1} parent=1 // pred_region
      _
    $region5: #{tpu_custom_call.1} parent=1 // pred_fallthru
      _
    // Predicated region
    $region6: #{tpu_custom_call.1} parent=1 // pred_check
      _
    $region7: #{tpu_custom_call.1} parent=1 // pred_check_branch
      %18 = sbr.rel (0) target = $region9
    $region8: #{tpu_custom_call.1} parent=1 // pred_region
      %s20 = ssub.s32 256, 256
      %21 = vsyncadd [#allocation3], %s20
      %s22 = sshll.u32 [#allocation2], 4
      %s23 = int_to_ptr.vmem [resolvable:$true] %s22
      %28 = dma.hbm_to_vmem [thread:$0]  %s1, 256, %s23, [#allocation3], 64, 64, 4
    $region9: #{tpu_custom_call.1} parent=1 // pred_fallthru
      _
    // Predicated region
    $region10: #{tpu_custom_call.1} parent=1 // pred_check
      _
    $region11: #{tpu_custom_call.1} parent=1 // pred_check_branch
      %30 = sbr.rel (0) target = $region13
    $region12: #{tpu_custom_call.1} parent=1 // pred_region
      _
    $region13: #{tpu_custom_call.1} parent=1 // pred_fallthru
      _
    // Predicated region
    $region14: #{tpu_custom_call.1} parent=1 // pred_check
      _
    $region15: #{tpu_custom_call.1} parent=1 // pred_check_branch
      %32 = sbr.rel (0) target = $region17
    $region16: #{tpu_custom_call.1} parent=1 // pred_region
      _
    $region17: #{tpu_custom_call.1} parent=1 // pred_fallthru
      _
    // Predicated region
    $region18: #{tpu_custom_call.1} parent=1 // pred_check
      _
    $region19: #{tpu_custom_call.1} parent=1 // pred_check_branch
      %34 = sbr.rel (0) target = $region21
    $region20: #{tpu_custom_call.1} parent=1 // pred_region
      %s36 = ssub.s32 16, 16
      %37 = vsyncadd [#allocation6], %s36
      %s39 = sshll.u32 [#allocation5], 4
      %s40 = int_to_ptr.vmem [resolvable:$true] %s39
      %42 = dma.hbm_to_vmem [thread:$0]  %s4, 16, %s40, [#allocation6]
    $region21: #{tpu_custom_call.1} parent=1 // pred_fallthru
      _
    // Predicated region
    $region22: #{tpu_custom_call.1} parent=1 // pred_check
      _
    $region23: #{tpu_custom_call.1} parent=1 // pred_check_branch
      %44 = sbr.rel (0) target = $region25
    $region24: #{tpu_custom_call.1} parent=1 // pred_region
      _
    $region25: #{tpu_custom_call.1} parent=1 // pred_fallthru
      _
    // Predicated region
    $region26: #{tpu_custom_call.1} parent=1 // pred_check
      _
    $region27: #{tpu_custom_call.1} parent=1 // pred_check_branch
      %46 = sbr.rel (0) target = $region29
    $region28: #{tpu_custom_call.1} parent=1 // pred_region
      _
    $region29: #{tpu_custom_call.1} parent=1 // pred_fallthru
      _
    // Predicated region
    $region30: #{tpu_custom_call.1} parent=1 // pred_check
      _
    $region31: #{tpu_custom_call.1} parent=1 // pred_check_branch
      %48 = sbr.rel (0) target = $region33
    $region32: #{tpu_custom_call.1} parent=1 // pred_region
      %49 = dma.done [#allocation3], 256
    $region33: #{tpu_custom_call.1} parent=1 // pred_fallthru
      _
    // Predicated region
    $region34: #{tpu_custom_call.1} parent=1 // pred_check
      _
    $region35: #{tpu_custom_call.1} parent=1 // pred_check_branch
      %51 = sbr.rel (0) target = $region37
    $region36: #{tpu_custom_call.1} parent=1 // pred_region
      %52 = dma.done [#allocation6], 16
    $region37: #{tpu_custom_call.1} parent=1 // pred_fallthru
      _
    %v54 = vld [vmem:[%s0] sm:$0xff]
    %v55 = vld [vmem:[#allocation2] sm:$0xf]
    %v56 = vld [vmem:[#allocation2 + $0x4] sm:$0xf]
    %v57 = vld [vmem:[#allocation2 + $0x8] sm:$0xf]
    %v58 = vld [vmem:[#allocation2 + $0xc] sm:$0xf]
    %v59 = vld [vmem:[%s2] sm:$0x1]
    %v60 = vpack.c.bf16 %v54, %v54
    %v62 = vlaneseq
    %v63 = vshrl.u32 %v62, 7
    %v64 = vsub.s32 0, %v63
    %v65 = vrot.slane %v59, %v64
    %v71 = vunpack.c.l.b16 %v55
    %v72 = vunpack.c.l.b16 %v56
    %v73 = vunpack.c.l.b16 %v57
    %v74 = vunpack.c.l.b16 %v58
    %v75 = vpack.c.b16 %v72, %v71
    %v76 = vpack.c.b16 %v74, %v73
    %vm79 = vcmask 261120
    %v81 = vsel %vm79, %v60, 0
    %83 = vmatprep.subr.bf16.mxu0 0
    %84 = vmatpush1.bf16.msra.mxu0 0
    %85 = vmatprep.subr.bf16.mxu0 0
    %86 = vmatpush1.bf16.msra.mxu0 0
    %87 = vmatprep.subr.bf16.mxu0 0
    %88 = vmatpush1.bf16.msra.mxu0 0
    %89 = vmatprep.subr.bf16.mxu0 0
    %90 = vmatpush1.bf16.msra.mxu0 0
    %91 = vmatprep.subr.bf16.mxu0 0
    %92 = vmatpush1.bf16.msra.mxu0 0
    %93 = vmatprep.subr.bf16.mxu0 0
    %94 = vmatpush1.bf16.msra.mxu0 0
    %95 = vmatprep.subr.bf16.mxu0 0
    %96 = vmatpush1.bf16.msra.mxu0 %v76
    %97 = vmatprep.subr.bf16.mxu0 0
    %98 = vmatpush1.bf16.msra.mxu0 %v75
    %99 = vmatprep.subr.bf16.mxu0 0
    %100 = vmatpush2.bf16.msra.mxu0 0
    %101 = vmatprep.subr.bf16.mxu0 0
    %102 = vmatpush2.bf16.msra.mxu0 0
    %103 = vmatprep.subr.bf16.mxu0 0
    %104 = vmatpush2.bf16.msra.mxu0 0
    %105 = vmatprep.subr.bf16.mxu0 0
    %106 = vmatpush2.bf16.msra.mxu0 0
    %107 = vmatprep.subr.bf16.mxu0 0
    %108 = vmatpush2.bf16.msra.mxu0 0
    %109 = vmatprep.subr.bf16.mxu0 0
    %110 = vmatpush2.bf16.msra.mxu0 0
    %111 = vmatprep.subr.bf16.mxu0 0
    %112 = vmatpush2.bf16.msra.mxu0 0
    %113 = vmatprep.subr.bf16.mxu0 0
    %114 = vmatpush2.bf16.msra.mxu0 0
    %115 = vmatprep.mubr.bf16.mxu0 0
    %116 = vmatmul.mubr.bf16.gmra.mxu0 %v81
    %v117 = vpop.f32.mrf.mxu0
    %v118 = vadd.f32 %v65, %v117
    %v119 = vpop.f32.mrf.mxu0
    %v120 = vpop.f32.mrf.mxu0
    %v121 = vpop.f32.mrf.mxu0
    %122 = vdwg.mxu0
    %v123 = vmax.f32 %v118, 0.0
    %v124 = vld [vmem:[%s3] sm:$0xf]
    %v125 = vld [vmem:[%s3 + $0x4] sm:$0xf]
    %v126 = vld [vmem:[%s3 + $0x8] sm:$0xf]
    %v127 = vld [vmem:[%s3 + $0xc] sm:$0xf]
    %v128 = vld [vmem:[%s3 + $0x10] sm:$0xf]
    %v129 = vld [vmem:[%s3 + $0x14] sm:$0xf]
    %v130 = vld [vmem:[%s3 + $0x18] sm:$0xf]
    %v131 = vld [vmem:[%s3 + $0x1c] sm:$0xf]
    %v132 = vld [vmem:[#allocation5] sm:$0x1]
    %v133 = vpack.c.bf16 %v123, %v123
    %v135 = vlaneseq
    %v136 = vshrl.u32 %v135, 7
    %v137 = vsub.s32 0, %v136
    %v138 = vrot.slane %v132, %v137
    %v148 = vunpack.c.l.b16 %v124
    %v149 = vunpack.c.l.b16 %v125
    %v150 = vunpack.c.l.b16 %v126
    %v151 = vunpack.c.l.b16 %v127
    %v152 = vunpack.c.l.b16 %v128
    %v153 = vunpack.c.l.b16 %v129
    %v154 = vunpack.c.l.b16 %v130
    %v155 = vunpack.c.l.b16 %v131
    %v156 = vpack.c.b16 %v149, %v148
    %v157 = vpack.c.b16 %v151, %v150
    %v158 = vpack.c.b16 %v153, %v152
    %v159 = vpack.c.b16 %v155, %v154
    %vm164 = vcmask 523264
    %v166 = vsel %vm164, %v133, 0
    %168 = vmatprep.subr.bf16.mxu0 0
    %169 = vmatpush1.bf16.msra.mxu0 0
    %170 = vmatprep.subr.bf16.mxu0 0
    %171 = vmatpush1.bf16.msra.mxu0 0
    %172 = vmatprep.subr.bf16.mxu0 0
    %173 = vmatpush1.bf16.msra.mxu0 0
    %174 = vmatprep.subr.bf16.mxu0 0
    %175 = vmatpush1.bf16.msra.mxu0 0
    %176 = vmatprep.subr.bf16.mxu0 0
    %177 = vmatpush1.bf16.msra.mxu0 %v159
    %178 = vmatprep.subr.bf16.mxu0 0
    %179 = vmatpush1.bf16.msra.mxu0 %v158
    %180 = vmatprep.subr.bf16.mxu0 0
    %181 = vmatpush1.bf16.msra.mxu0 %v157
    %182 = vmatprep.subr.bf16.mxu0 0
    %183 = vmatpush1.bf16.msra.mxu0 %v156
    %184 = vmatprep.subr.bf16.mxu0 0
    %185 = vmatpush2.bf16.msra.mxu0 0
    %186 = vmatprep.subr.bf16.mxu0 0
    %187 = vmatpush2.bf16.msra.mxu0 0
    %188 = vmatprep.subr.bf16.mxu0 0
    %189 = vmatpush2.bf16.msra.mxu0 0
    %190 = vmatprep.subr.bf16.mxu0 0
    %191 = vmatpush2.bf16.msra.mxu0 0
    %192 = vmatprep.subr.bf16.mxu0 0
    %193 = vmatpush2.bf16.msra.mxu0 0
    %194 = vmatprep.subr.bf16.mxu0 0
    %195 = vmatpush2.bf16.msra.mxu0 0
    %196 = vmatprep.subr.bf16.mxu0 0
    %197 = vmatpush2.bf16.msra.mxu0 0
    %198 = vmatprep.subr.bf16.mxu0 0
    %199 = vmatpush2.bf16.msra.mxu0 0
    %200 = vmatprep.mubr.bf16.mxu0 0
    %201 = vmatmul.mubr.bf16.gmra.mxu0 %v166
    %v202 = vpop.f32.mrf.mxu0
    %v203 = vadd.f32 %v138, %v202
    %v204 = vpop.f32.mrf.mxu0
    %v205 = vpop.f32.mrf.mxu0
    %v206 = vpop.f32.mrf.mxu0
    %207 = vdwg.mxu0
    %v208 = vmax.f32 %v203, 0.0
    %v209 = vld [vmem:[%s5] sm:$0xf]
    %v210 = vld [vmem:[%s5 + $0x4] sm:$0xf]
    %v211 = vld [vmem:[%s5 + $0x8] sm:$0xf]
    %v212 = vld [vmem:[%s5 + $0xc] sm:$0xf]
    %v213 = vld [vmem:[%s5 + $0x10] sm:$0xf]
    %v214 = vld [vmem:[%s5 + $0x14] sm:$0xf]
    %v215 = vld [vmem:[%s5 + $0x18] sm:$0xf]
    %v216 = vld [vmem:[%s5 + $0x1c] sm:$0xf]
    %v217 = vld [vmem:[%s6] sm:$0x1]
    %v218 = vpack.c.bf16 %v208, %v208
    %v220 = vlaneseq
    %v221 = vshrl.u32 %v220, 7
    %v222 = vsub.s32 0, %v221
    %v223 = vrot.slane %v217, %v222
    %v233 = vunpack.c.l.b16 %v209
    %v234 = vunpack.c.l.b16 %v210
    %v235 = vunpack.c.l.b16 %v211
    %v236 = vunpack.c.l.b16 %v212
    %v237 = vunpack.c.l.b16 %v213
    %v238 = vunpack.c.l.b16 %v214
    %v239 = vunpack.c.l.b16 %v215
    %v240 = vunpack.c.l.b16 %v216
    %v241 = vpack.c.b16 %v234, %v233
    %v242 = vpack.c.b16 %v236, %v235
    %v243 = vpack.c.b16 %v238, %v237
    %v244 = vpack.c.b16 %v240, %v239
    %v250 = vsel %vm164, %v218, 0
    %252 = vmatprep.subr.bf16.mxu0 0
    %253 = vmatpush1.bf16.msra.mxu0 0
    %254 = vmatprep.subr.bf16.mxu0 0
    %255 = vmatpush1.bf16.msra.mxu0 0
    %256 = vmatprep.subr.bf16.mxu0 0
    %257 = vmatpush1.bf16.msra.mxu0 0
    %258 = vmatprep.subr.bf16.mxu0 0
    %259 = vmatpush1.bf16.msra.mxu0 0
    %260 = vmatprep.subr.bf16.mxu0 0
    %261 = vmatpush1.bf16.msra.mxu0 %v244
    %262 = vmatprep.subr.bf16.mxu0 0
    %263 = vmatpush1.bf16.msra.mxu0 %v243
    %264 = vmatprep.subr.bf16.mxu0 0
    %265 = vmatpush1.bf16.msra.mxu0 %v242
    %266 = vmatprep.subr.bf16.mxu0 0
    %267 = vmatpush1.bf16.msra.mxu0 %v241
    %268 = vmatprep.subr.bf16.mxu0 0
    %269 = vmatpush2.bf16.msra.mxu0 0
    %270 = vmatprep.subr.bf16.mxu0 0
    %271 = vmatpush2.bf16.msra.mxu0 0
    %272 = vmatprep.subr.bf16.mxu0 0
    %273 = vmatpush2.bf16.msra.mxu0 0
    %274 = vmatprep.subr.bf16.mxu0 0
    %275 = vmatpush2.bf16.msra.mxu0 0
    %276 = vmatprep.subr.bf16.mxu0 0
    %277 = vmatpush2.bf16.msra.mxu0 0
    %278 = vmatprep.subr.bf16.mxu0 0
    %279 = vmatpush2.bf16.msra.mxu0 0
    %280 = vmatprep.subr.bf16.mxu0 0
    %281 = vmatpush2.bf16.msra.mxu0 0
    %282 = vmatprep.subr.bf16.mxu0 0
    %283 = vmatpush2.bf16.msra.mxu0 0
    %284 = vmatprep.mubr.bf16.mxu0 0
    %285 = vmatmul.mubr.bf16.gmra.mxu0 %v250
    %v286 = vpop.f32.mrf.mxu0
    %v287 = vadd.f32 %v223, %v286
    %v288 = vpop.f32.mrf.mxu0
    %v289 = vpop.f32.mrf.mxu0
    %v290 = vpop.f32.mrf.mxu0
    %291 = vdwg.mxu0
    %vm292 = vcmask 130048
    %293 = vst.msk [vmem:[#allocation7] sm:$0xff] %vm292, %v287
    // Predicated region
    $region38: #{tpu_custom_call.1} parent=1 // pred_check
      _
    $region39: #{tpu_custom_call.1} parent=1 // pred_check_branch
      %295 = sbr.rel (0) target = $region41
    $region40: #{tpu_custom_call.1} parent=1 // pred_region
      %s297 = ssub.s32 128, 128
      %298 = vsyncadd [#allocation4], %s297
      %s300 = sshll.u32 [#allocation7], 4
      %s301 = int_to_ptr.vmem [resolvable:$true] %s300
      %303 = dma.vmem_to_hbm [thread:$0]  %s301, 128, %s7, [#allocation4]
    $region41: #{tpu_custom_call.1} parent=1 // pred_fallthru
      _
    // Predicated region
    $region42: #{tpu_custom_call.1} parent=1 // pred_check
      _
    $region43: #{tpu_custom_call.1} parent=1 // pred_check_branch
      %305 = sbr.rel (0) target = $region45
    $region44: #{tpu_custom_call.1} parent=1 // pred_region
      %306 = dma.done [#allocation4], 128
    $region45: #{tpu_custom_call.1} parent=1 // pred_fallthru
      _
    %307 = vsyncpa [#allocation3], 1
    %308 = vsyncpa [#allocation6], 1
    %309 = vsyncpa [#allocation4], 1

// kernel: tpu_custom_call.1
$region0: #{tpu_custom_call.1}
  #allocation0 [shape = 'u32[]', space=smem, size = 0x4, offset = 0x4, fixed_abs, tag = 'smem constant byte address 0x4 - core index']
  #allocation1 [shape = 'u32[144,128]{1,0:T(1,128)}', space=vmem, size = 0x12000, scoped, tag = 'internal scratch']
  %s0 = inlined_call_operand.vmem [shape: f32[8,32], index: 0, kind: input, shape index: {}]
  %s1 = inlined_call_operand.hbm [shape: bf16[32,64], index: 1, kind: input, shape index: {}]
  %s2 = inlined_call_operand.vmem [shape: f32[1,64], index: 2, kind: input, shape index: {}]
  %s3 = inlined_call_operand.vmem [shape: bf16[64,64], index: 3, kind: input, shape index: {}]
  %s4 = inlined_call_operand.hbm [shape: f32[1,64], index: 4, kind: input, shape index: {}]
  %s5 = inlined_call_operand.vmem [shape: bf16[64,16], index: 5, kind: input, shape index: {}]
  %s6 = inlined_call_operand.vmem [shape: f32[1,16], index: 6, kind: input, shape index: {}]
  %s7 = inlined_call_operand.hbm [shape: f32[8,16], index: 7, kind: output, shape index: {}]
  %s8 = sld [smem:[#allocation0]]
  $region46: #{tpu_custom_call.1} parent=0
    _
  %s10 = ssub.s32 1, %s8
  %s11 = scalar_select 0, %s10, %s8
  $region1: #{tpu_custom_call.1} parent=0
    #allocation2 [shape = 'u8[8192]{0}', space=vmem, size = 0x2000, scoped, tag = 'input window, operand 1, single buffered']
    #allocation3 [shape = 's32[1]{0}', space=sflag, size = 0x4, scoped, tag = 'scoped memory for tpu_custom_call.1']
    #allocation4 [shape = 's32[1]{0}', space=sflag, size = 0x4, scoped, tag = 'scoped memory for tpu_custom_call.1']
    #allocation5 [shape = 'u8[512]{0}', space=vmem, size = 0x400, scoped, tag = 'input window, operand 4, single buffered']
    #allocation6 [shape = 's32[1]{0}', space=sflag, size = 0x4, scoped, tag = 'scoped memory for tpu_custom_call.1']
    #allocation7 [shape = 'u8[4096]{0}', space=vmem, size = 0x1000, scoped, tag = 'output window, operand 0, single buffered']
    %12 = vsyncpa [#allocation3], 0
    %13 = vsyncpa [#allocation6], 0
    %14 = vsyncpa [#allocation4], 0
    // Predicated region
    $region2: #{tpu_custom_call.1} parent=1 // pred_check
      _
    $region3: #{tpu_custom_call.1} parent=1 // pred_check_branch
      %16 = sbr.rel (0) target = $region5
    $region4: #{tpu_custom_call.1} parent=1 // pred_region
      _
    $region5: #{tpu_custom_call.1} parent=1 // pred_fallthru
      _
    // Predicated region
    $region6: #{tpu_custom_call.1} parent=1 // pred_check
      _
    $region7: #{tpu_custom_call.1} parent=1 // pred_check_branch
      %18 = sbr.rel (0) target = $region9
    $region8: #{tpu_custom_call.1} parent=1 // pred_region
      %s20 = ssub.s32 256, 256
      %21 = vsyncadd [#allocation3], %s20
      %s22 = sshll.u32 [#allocation2], 4
      %s23 = int_to_ptr.vmem [resolvable:$true] %s22
      %28 = dma.hbm_to_vmem [thread:$0]  %s1, 256, %s23, [#allocation3], 64, 64, 4
    $region9: #{tpu_custom_call.1} parent=1 // pred_fallthru
      _
    // Predicated region
    $region10: #{tpu_custom_call.1} parent=1 // pred_check
      _
    $region11: #{tpu_custom_call.1} parent=1 // pred_check_branch
      %30 = sbr.rel (0) target = $region13
    $region12: #{tpu_custom_call.1} parent=1 // pred_region
      _
    $region13: #{tpu_custom_call.1} parent=1 // pred_fallthru
      _
    // Predicated region
    $region14: #{tpu_custom_call.1} parent=1 // pred_check
      _
    $region15: #{tpu_custom_call.1} parent=1 // pred_check_branch
      %32 = sbr.rel (0) target = $region17
    $region16: #{tpu_custom_call.1} parent=1 // pred_region
      _
    $region17: #{tpu_custom_call.1} parent=1 // pred_fallthru
      _
    // Predicated region
    $region18: #{tpu_custom_call.1} parent=1 // pred_check
      _
    $region19: #{tpu_custom_call.1} parent=1 // pred_check_branch
      %34 = sbr.rel (0) target = $region21
    $region20: #{tpu_custom_call.1} parent=1 // pred_region
      %s36 = ssub.s32 16, 16
      %37 = vsyncadd [#allocation6], %s36
      %s39 = sshll.u32 [#allocation5], 4
      %s40 = int_to_ptr.vmem [resolvable:$true] %s39
      %42 = dma.hbm_to_vmem [thread:$0]  %s4, 16, %s40, [#allocation6]
    $region21: #{tpu_custom_call.1} parent=1 // pred_fallthru
      _
    // Predicated region
    $region22: #{tpu_custom_call.1} parent=1 // pred_check
      _
    $region23: #{tpu_custom_call.1} parent=1 // pred_check_branch
      %44 = sbr.rel (0) target = $region25
    $region24: #{tpu_custom_call.1} parent=1 // pred_region
      _
    $region25: #{tpu_custom_call.1} parent=1 // pred_fallthru
      _
    // Predicated region
    $region26: #{tpu_custom_call.1} parent=1 // pred_check
      _
    $region27: #{tpu_custom_call.1} parent=1 // pred_check_branch
      %46 = sbr.rel (0) target = $region29
    $region28: #{tpu_custom_call.1} parent=1 // pred_region
      _
    $region29: #{tpu_custom_call.1} parent=1 // pred_fallthru
      _
    // Predicated region
    $region30: #{tpu_custom_call.1} parent=1 // pred_check
      _
    $region31: #{tpu_custom_call.1} parent=1 // pred_check_branch
      %48 = sbr.rel (0) target = $region33
    $region32: #{tpu_custom_call.1} parent=1 // pred_region
      %49 = dma.done [#allocation3], 256
    $region33: #{tpu_custom_call.1} parent=1 // pred_fallthru
      _
    // Predicated region
    $region34: #{tpu_custom_call.1} parent=1 // pred_check
      _
    $region35: #{tpu_custom_call.1} parent=1 // pred_check_branch
      %51 = sbr.rel (0) target = $region37
    $region36: #{tpu_custom_call.1} parent=1 // pred_region
      %52 = dma.done [#allocation6], 16
    $region37: #{tpu_custom_call.1} parent=1 // pred_fallthru
      _
    %v54 = vld [vmem:[%s0] sm:$0xff]
    %v55 = vld [vmem:[#allocation2] sm:$0xf]
    %v56 = vld [vmem:[#allocation2 + $0x4] sm:$0xf]
    %v57 = vld [vmem:[#allocation2 + $0x8] sm:$0xf]
    %v58 = vld [vmem:[#allocation2 + $0xc] sm:$0xf]
    %v59 = vld [vmem:[%s2] sm:$0x1]
    %v60 = vpack.c.bf16 %v54, %v54
    %v62 = vlaneseq
    %v63 = vshrl.u32 %v62, 7
    %v64 = vsub.s32 0, %v63
    %v65 = vrot.slane %v59, %v64
    %v71 = vunpack.c.l.b16 %v55
    %v72 = vunpack.c.l.b16 %v56
    %v73 = vunpack.c.l.b16 %v57
    %v74 = vunpack.c.l.b16 %v58
    %v75 = vpack.c.b16 %v72, %v71
    %v76 = vpack.c.b16 %v74, %v73
    %vm79 = vcmask 261120
    %v81 = vsel %vm79, %v60, 0
    %83 = vmatprep.subr.bf16.mxu0 0
    %84 = vmatpush1.bf16.msra.mxu0 0
    %85 = vmatprep.subr.bf16.mxu0 0
    %86 = vmatpush1.bf16.msra.mxu0 0
    %87 = vmatprep.subr.bf16.mxu0 0
    %88 = vmatpush1.bf16.msra.mxu0 0
    %89 = vmatprep.subr.bf16.mxu0 0
    %90 = vmatpush1.bf16.msra.mxu0 0
    %91 = vmatprep.subr.bf16.mxu0 0
    %92 = vmatpush1.bf16.msra.mxu0 0
    %93 = vmatprep.subr.bf16.mxu0 0
    %94 = vmatpush1.bf16.msra.mxu0 0
    %95 = vmatprep.subr.bf16.mxu0 0
    %96 = vmatpush1.bf16.msra.mxu0 %v76
    %97 = vmatprep.subr.bf16.mxu0 0
    %98 = vmatpush1.bf16.msra.mxu0 %v75
    %99 = vmatprep.subr.bf16.mxu0 0
    %100 = vmatpush2.bf16.msra.mxu0 0
    %101 = vmatprep.subr.bf16.mxu0 0
    %102 = vmatpush2.bf16.msra.mxu0 0
    %103 = vmatprep.subr.bf16.mxu0 0
    %104 = vmatpush2.bf16.msra.mxu0 0
    %105 = vmatprep.subr.bf16.mxu0 0
    %106 = vmatpush2.bf16.msra.mxu0 0
    %107 = vmatprep.subr.bf16.mxu0 0
    %108 = vmatpush2.bf16.msra.mxu0 0
    %109 = vmatprep.subr.bf16.mxu0 0
    %110 = vmatpush2.bf16.msra.mxu0 0
    %111 = vmatprep.subr.bf16.mxu0 0
    %112 = vmatpush2.bf16.msra.mxu0 0
    %113 = vmatprep.subr.bf16.mxu0 0
    %114 = vmatpush2.bf16.msra.mxu0 0
    %115 = vmatprep.mubr.bf16.mxu0 0
    %116 = vmatmul.mubr.bf16.gmra.mxu0 %v81
    %v117 = vpop.f32.mrf.mxu0
    %v118 = vadd.f32 %v65, %v117
    %v119 = vpop.f32.mrf.mxu0
    %v120 = vpop.f32.mrf.mxu0
    %v121 = vpop.f32.mrf.mxu0
    %122 = vdwg.mxu0
    %v123 = vmax.f32 %v118, 0.0
    %v124 = vld [vmem:[%s3] sm:$0xf]
    %v125 = vld [vmem:[%s3 + $0x4] sm:$0xf]
    %v126 = vld [vmem:[%s3 + $0x8] sm:$0xf]
    %v127 = vld [vmem:[%s3 + $0xc] sm:$0xf]
    %v128 = vld [vmem:[%s3 + $0x10] sm:$0xf]
    %v129 = vld [vmem:[%s3 + $0x14] sm:$0xf]
    %v130 = vld [vmem:[%s3 + $0x18] sm:$0xf]
    %v131 = vld [vmem:[%s3 + $0x1c] sm:$0xf]
    %v132 = vld [vmem:[#allocation5] sm:$0x1]
    %v133 = vpack.c.bf16 %v123, %v123
    %v135 = vlaneseq
    %v136 = vshrl.u32 %v135, 7
    %v137 = vsub.s32 0, %v136
    %v138 = vrot.slane %v132, %v137
    %v148 = vunpack.c.l.b16 %v124
    %v149 = vunpack.c.l.b16 %v125
    %v150 = vunpack.c.l.b16 %v126
    %v151 = vunpack.c.l.b16 %v127
    %v152 = vunpack.c.l.b16 %v128
    %v153 = vunpack.c.l.b16 %v129
    %v154 = vunpack.c.l.b16 %v130
    %v155 = vunpack.c.l.b16 %v131
    %v156 = vpack.c.b16 %v149, %v148
    %v157 = vpack.c.b16 %v151, %v150
    %v158 = vpack.c.b16 %v153, %v152
    %v159 = vpack.c.b16 %v155, %v154
    %vm164 = vcmask 523264
    %v166 = vsel %vm164, %v133, 0
    %168 = vmatprep.subr.bf16.mxu0 0
    %169 = vmatpush1.bf16.msra.mxu0 0
    %170 = vmatprep.subr.bf16.mxu0 0
    %171 = vmatpush1.bf16.msra.mxu0 0
    %172 = vmatprep.subr.bf16.mxu0 0
    %173 = vmatpush1.bf16.msra.mxu0 0
    %174 = vmatprep.subr.bf16.mxu0 0
    %175 = vmatpush1.bf16.msra.mxu0 0
    %176 = vmatprep.subr.bf16.mxu0 0
    %177 = vmatpush1.bf16.msra.mxu0 %v159
    %178 = vmatprep.subr.bf16.mxu0 0
    %179 = vmatpush1.bf16.msra.mxu0 %v158
    %180 = vmatprep.subr.bf16.mxu0 0
    %181 = vmatpush1.bf16.msra.mxu0 %v157
    %182 = vmatprep.subr.bf16.mxu0 0
    %183 = vmatpush1.bf16.msra.mxu0 %v156
    %184 = vmatprep.subr.bf16.mxu0 0
    %185 = vmatpush2.bf16.msra.mxu0 0
    %186 = vmatprep.subr.bf16.mxu0 0
    %187 = vmatpush2.bf16.msra.mxu0 0
    %188 = vmatprep.subr.bf16.mxu0 0
    %189 = vmatpush2.bf16.msra.mxu0 0
    %190 = vmatprep.subr.bf16.mxu0 0
    %191 = vmatpush2.bf16.msra.mxu0 0
    %192 = vmatprep.subr.bf16.mxu0 0
    %193 = vmatpush2.bf16.msra.mxu0 0
    %194 = vmatprep.subr.bf16.mxu0 0
    %195 = vmatpush2.bf16.msra.mxu0 0
    %196 = vmatprep.subr.bf16.mxu0 0
    %197 = vmatpush2.bf16.msra.mxu0 0
    %198 = vmatprep.subr.bf16.mxu0 0
    %199 = vmatpush2.bf16.msra.mxu0 0
    %200 = vmatprep.mubr.bf16.mxu0 0
    %201 = vmatmul.mubr.bf16.gmra.mxu0 %v166
    %v202 = vpop.f32.mrf.mxu0
    %v203 = vadd.f32 %v138, %v202
    %v204 = vpop.f32.mrf.mxu0
    %v205 = vpop.f32.mrf.mxu0
    %v206 = vpop.f32.mrf.mxu0
    %207 = vdwg.mxu0
    %v208 = vmax.f32 %v203, 0.0
    %v209 = vld [vmem:[%s5] sm:$0xf]
    %v210 = vld [vmem:[%s5 + $0x4] sm:$0xf]
    %v211 = vld [vmem:[%s5 + $0x8] sm:$0xf]
    %v212 = vld [vmem:[%s5 + $0xc] sm:$0xf]
    %v213 = vld [vmem:[%s5 + $0x10] sm:$0xf]
    %v214 = vld [vmem:[%s5 + $0x14] sm:$0xf]
    %v215 = vld [vmem:[%s5 + $0x18] sm:$0xf]
    %v216 = vld [vmem:[%s5 + $0x1c] sm:$0xf]
    %v217 = vld [vmem:[%s6] sm:$0x1]
    %v218 = vpack.c.bf16 %v208, %v208
    %v220 = vlaneseq
    %v221 = vshrl.u32 %v220, 7
    %v222 = vsub.s32 0, %v221
    %v223 = vrot.slane %v217, %v222
    %v233 = vunpack.c.l.b16 %v209
    %v234 = vunpack.c.l.b16 %v210
    %v235 = vunpack.c.l.b16 %v211
    %v236 = vunpack.c.l.b16 %v212
    %v237 = vunpack.c.l.b16 %v213
    %v238 = vunpack.c.l.b16 %v214
    %v239 = vunpack.c.l.b16 %v215
    %v240 = vunpack.c.l.b16 %v216
    %v241 = vpack.c.b16 %v234, %v233
    %v242 = vpack.c.b16 %v236, %v235
    %v243 = vpack.c.b16 %v238, %v237
    %v244 = vpack.c.b16 %v240, %v239
    %v250 = vsel %vm164, %v218, 0
    %252 = vmatprep.subr.bf16.mxu0 0
    %253 = vmatpush1.bf16.msra.mxu0 0
    %254 = vmatprep.subr.bf16.mxu0 0
    %255 = vmatpush1.bf16.msra.mxu0 0
    %256 = vmatprep.subr.bf16.mxu0 0
    %257 = vmatpush1.bf16.msra.mxu0 0
    %258 = vmatprep.subr.bf16.mxu0 0
    %259 = vmatpush1.bf16.msra.mxu0 0
    %260 = vmatprep.subr.bf16.mxu0 0
    %261 = vmatpush1.bf16.msra.mxu0 %v244
    %262 = vmatprep.subr.bf16.mxu0 0
    %263 = vmatpush1.bf16.msra.mxu0 %v243
    %264 = vmatprep.subr.bf16.mxu0 0
    %265 = vmatpush1.bf16.msra.mxu0 %v242
    %266 = vmatprep.subr.bf16.mxu0 0
    %267 = vmatpush1.bf16.msra.mxu0 %v241
    %268 = vmatprep.subr.bf16.mxu0 0
    %269 = vmatpush2.bf16.msra.mxu0 0
    %270 = vmatprep.subr.bf16.mxu0 0
    %271 = vmatpush2.bf16.msra.mxu0 0
    %272 = vmatprep.subr.bf16.mxu0 0
    %273 = vmatpush2.bf16.msra.mxu0 0
    %274 = vmatprep.subr.bf16.mxu0 0
    %275 = vmatpush2.bf16.msra.mxu0 0
    %276 = vmatprep.subr.bf16.mxu0 0
    %277 = vmatpush2.bf16.msra.mxu0 0
    %278 = vmatprep.subr.bf16.mxu0 0
    %279 = vmatpush2.bf16.msra.mxu0 0
    %280 = vmatprep.subr.bf16.mxu0 0
    %281 = vmatpush2.bf16.msra.mxu0 0
    %282 = vmatprep.subr.bf16.mxu0 0
    %283 = vmatpush2.bf16.msra.mxu0 0
    %284 = vmatprep.mubr.bf16.mxu0 0
    %285 = vmatmul.mubr.bf16.gmra.mxu0 %v250
    %v286 = vpop.f32.mrf.mxu0
    %v287 = vadd.f32 %v223, %v286
    %v288 = vpop.f32.mrf.mxu0
    %v289 = vpop.f32.mrf.mxu0
    %v290 = vpop.f32.mrf.mxu0
    %291 = vdwg.mxu0
    %vm292 = vcmask 130048
    %293 = vst.msk [vmem:[#allocation7] sm:$0xff] %vm292, %v287
    // Predicated region
    $region38: #{tpu_custom_call.1} parent=1 // pred_check
      _
    $region39: #{tpu_custom_call.1} parent=1 // pred_check_branch
      %295 = sbr.rel (0) target = $region41
    $region40: #{tpu_custom_call.1} parent=1 // pred_region
      %s297 = ssub.s32 128, 128
      %298 = vsyncadd [#allocation4], %s297
      %s300 = sshll.u32 [#allocation7], 4
      %s301 = int_to_ptr.vmem [resolvable:$true] %s300
      %303 = dma.vmem_to_hbm [thread:$0]  %s301, 128, %s7, [#allocation4]
    $region41: #{tpu_custom_call.1} parent=1 // pred_fallthru
      _
    // Predicated region
    $region42: #{tpu_custom_call.1} parent=1 // pred_check
      _
    $region43: #{tpu_custom_call.1} parent=1 // pred_check_branch
      %305 = sbr.rel (0) target = $region45
    $region44: #{tpu_custom_call.1} parent=1 // pred_region
      %306 = dma.done [#allocation4], 128
    $region45: #{tpu_custom_call.1} parent=1 // pred_fallthru
      _
    %307 = vsyncpa [#allocation3], 1
    %308 = vsyncpa [#allocation6], 1
    %309 = vsyncpa [#allocation4], 1

</llo_original>
